<compile_context>
chip_gen: v5e
topology: v5e:2x2
jax: 0.10.0
libtpu: 0.0.40
codegen_flags: <defaults>
</compile_context>

<pallas_src>
import jax
import jax.numpy as jnp
from jax.experimental import pallas as pl
from jax.experimental.pallas import tpu as pltpu


def _round_up(x, m):
    return (x + m - 1) // m * m


def _gnn_kernel(feat_ref, w_ref, b_ref, adj_ref, out_ref, seq_ref):
    """One (batch, row-tile) grid step.

    feat_ref : (1, N_pad, F_in)      resident per batch element
    w_ref    : (F_in, F_out_pad)     resident across the whole grid
    b_ref    : (1, F_out_pad)        resident across the whole grid
    adj_ref  : (1, TM, N_pad)        streamed adjacency row tile
    out_ref  : (1, TM, F_out_pad)    streamed output row tile
    seq_ref  : (N_pad, F_out_pad)    VMEM scratch holding transform(feat)
    """
    # seq = feat @ W + b, computed once per graph (first row tile) and kept
    # resident in VMEM for every subsequent row tile of this graph.
    @pl.when(pl.program_id(1) == 0)
    def _():
        seq = jnp.dot(feat_ref[0], w_ref[...],
                      preferred_element_type=jnp.float32) + b_ref[...]
        seq_ref[...] = seq.astype(seq_ref.dtype)

    # Graph aggregation for this row tile: (TM, N_pad) @ (N_pad, F_out_pad).
    ret = jnp.dot(adj_ref[0], seq_ref[...],
                  preferred_element_type=jnp.float32)
    # ReLU epilogue in f32 vregs; cast only at the final store.
    out_ref[0] = jnp.maximum(ret, 0.0).astype(out_ref.dtype)


def gnn_forward(feat, adj, w, b, *, block_rows=None, compute_dtype=None,
                out_dtype=jnp.float32):
    """Fused GNN forward: ReLU(adj @ (feat @ W + b)).

    feat: [B, N, F_in] or [N, F_in]; adj: [B, N, N] or [N, N];
    w: [F_in, F_out]; b: [F_out] or [1, F_out].
    """
    squeeze = feat.ndim == 2
    if squeeze:
        feat, adj = feat[None], adj[None]
    B, N, F_in = feat.shape
    F_out = w.shape[1]
    b = b.reshape(1, F_out)
    if compute_dtype is None:
        compute_dtype = feat.dtype
    itemsize = jnp.dtype(compute_dtype).itemsize

    # Lane-dense output: pad F_out to a multiple of 128.
    F_out_p = _round_up(F_out, 128)

    # Row tile: multiple of 8 sublanes (128/256 for real graph sizes); clamp so
    # two double-buffered (TM, N_pad) adj tiles stay <= ~16 MiB (fits v7x's
    # 64 MiB/TC VMEM with room for seq, feat, W and output tiles).
    if block_rows is None:
        tm = min(256, _round_up(N, 8))
        while tm > 8 and 2 * tm * _round_up(N, 8) * itemsize > 16 * 1024 * 1024:
            tm //= 2
    else:
        tm = max(8, _round_up(block_rows, 8))
    N_p = _round_up(N, tm)

    cd = compute_dtype
    feat_p = jnp.zeros((B, N_p, F_in), cd).at[:, :N, :].set(feat.astype(cd))
    adj_p = jnp.zeros((B, N_p, N_p), cd).at[:, :N, :N].set(adj.astype(cd))
    w_p = jnp.zeros((F_in, F_out_p), cd).at[:, :F_out].set(w.astype(cd))
    b_p = jnp.zeros((1, F_out_p), cd).at[:, :F_out].set(b.astype(cd))

    n_tiles = N_p // tm
    flops = int(B * (2 * N_p * F_in * F_out_p + 2 * N_p * N_p * F_out_p))
    bytes_accessed = int(
        (B * N_p * F_in + B * N_p * N_p + F_in * F_out_p + F_out_p) * itemsize
        + B * N_p * F_out_p * jnp.dtype(out_dtype).itemsize)

    out = pl.pallas_call(
        _gnn_kernel,
        out_shape=jax.ShapeDtypeStruct((B, N_p, F_out_p), out_dtype),
        grid=(B, n_tiles),
        in_specs=[
            pl.BlockSpec((1, N_p, F_in), lambda bi, ti: (bi, 0, 0)),
            pl.BlockSpec((F_in, F_out_p), lambda bi, ti: (0, 0)),
            pl.BlockSpec((1, F_out_p), lambda bi, ti: (0, 0)),
            pl.BlockSpec((1, tm, N_p), lambda bi, ti: (bi, ti, 0)),
        ],
        out_specs=pl.BlockSpec((1, tm, F_out_p), lambda bi, ti: (bi, ti, 0)),
        scratch_shapes=[pltpu.VMEM((N_p, F_out_p), cd)],
        compiler_params=pltpu.CompilerParams(
            # Batch axis can shard across v7x's 2 TensorCores; the row-tile
            # axis reads the seq scratch written at tile 0, so it must be
            # sequential ("arbitrary").
            dimension_semantics=("parallel", "arbitrary"),
            vmem_limit_bytes=48 * 1024 * 1024,
        ),
        cost_estimate=pl.CostEstimate(
            flops=flops, transcendentals=0, bytes_accessed=bytes_accessed),
    )(feat_p, w_p, b_p, adj_p)

    out = out[:, :N, :F_out]
    if squeeze:
        out = out[0]
    return out


if __name__ == "__main__":
    # Small shapes consistent with the module: B graphs, N nodes, F_in -> F_out.
    B, N, F_IN, F_OUT = 2, 8, 32, 32

    key = jax.random.PRNGKey(0)
    k_feat, k_adj, k_w, k_b = jax.random.split(key, 4)

    feat = jax.random.normal(k_feat, (B, N, F_IN), dtype=jnp.float32)
    # Dense 0/1 adjacency with self-loops (deterministic).
    adj = (jax.random.uniform(k_adj, (B, N, N)) > 0.5).astype(jnp.float32)
    adj = adj + jnp.eye(N, dtype=jnp.float32)[None]

    # nn.Linear-style init: U(-1/sqrt(F_in), 1/sqrt(F_in)).
    bound = 1.0 / (F_IN ** 0.5)
    w = jax.random.uniform(k_w, (F_IN, F_OUT), minval=-bound, maxval=bound,
                           dtype=jnp.float32)
    b = jax.random.uniform(k_b, (1, F_OUT), minval=-bound, maxval=bound,
                           dtype=jnp.float32)

    # Pure-JAX reference.
    ref = jnp.maximum(jnp.matmul(adj, feat @ w + b), 0.0)

    # f32 compute path (exact).
    out = jax.block_until_ready(gnn_forward(feat, adj, w, b))
    assert out.shape == (B, N, F_OUT)
    assert jnp.allclose(out, ref, atol=1e-5, rtol=1e-5)

    # bf16 compute path (recommended on v6e/v7x MXU; adj is 0/1 so exact there,
    # accumulation stays f32). Loose tolerance vs the f32 reference.
    out_bf16 = jax.block_until_ready(
        gnn_forward(feat, adj, w, b, compute_dtype=jnp.bfloat16))
    assert out_bf16.shape == (B, N, F_OUT)
    assert jnp.allclose(out_bf16, ref, atol=2.5e-1)

    print("KERNEL_OK")
</pallas_src>

<mosaic_0001>
module attributes {stable_mosaic.version = 11 : i64} {
  func.func @_gnn_kernel(%arg0: i32, %arg1: i32, %arg2: memref<1x8x32xf32, #tpu.memory_space<vmem>>, %arg3: memref<32x128xf32, #tpu.memory_space<vmem>>, %arg4: memref<1x128xf32, #tpu.memory_space<vmem>>, %arg5: memref<1x8x8xf32, #tpu.memory_space<vmem>>, %arg6: memref<1x8x128xf32, #tpu.memory_space<vmem>>, %arg7: memref<8x128xf32, #tpu.memory_space<vmem>>) attributes {dimension_semantics = [#tpu.dimension_semantics<parallel>, #tpu.dimension_semantics<arbitrary>], iteration_bounds = array<i64: 2, 1>, scalar_prefetch = 0 : i64, scratch_operands = 1 : i64, tpu.core_type = #tpu.core_type<tc>, window_params = [{transform_indices = @transform_0, window_bounds = array<i64: 1, 8, 32>}, {pipeline_mode = #tpu.pipeline_mode<synchronous>, transform_indices = @transform_1, window_bounds = array<i64: 32, 128>}, {pipeline_mode = #tpu.pipeline_mode<synchronous>, transform_indices = @transform_2, window_bounds = array<i64: 1, 128>}, {transform_indices = @transform_3, window_bounds = array<i64: 1, 8, 8>}, {transform_indices = @transform_4, window_bounds = array<i64: 1, 8, 128>}]} {
    %c0_i32 = arith.constant 0 : i32
    %0 = arith.cmpi eq, %arg1, %c0_i32 : i32
    %1 = arith.extui %0 : i1 to i32
    %c0_i32_0 = arith.constant 0 : i32
    %2 = arith.cmpi ne, %1, %c0_i32_0 : i32
    scf.if %2 {
      %c0_9 = arith.constant 0 : index
      %c0_10 = arith.constant 0 : index
      %c0_11 = arith.constant 0 : index
      %12 = vector.load %arg2[%c0_9, %c0_10, %c0_11] : memref<1x8x32xf32, #tpu.memory_space<vmem>>, vector<1x8x32xf32>
      %13 = vector.shape_cast %12 : vector<1x8x32xf32> to vector<8x32xf32>
      %c0_12 = arith.constant 0 : index
      %c0_13 = arith.constant 0 : index
      %14 = vector.load %arg3[%c0_12, %c0_13] : memref<32x128xf32, #tpu.memory_space<vmem>>, vector<32x128xf32>
      %cst_14 = arith.constant dense<0.000000e+00> : vector<8x128xf32>
      %15 = tpu.matmul %13, %14, %cst_14 {dimension_numbers = #tpu.dot_dimension_numbers<[1], [0], [0], [1], [0, 0, 1, 1], [], []>} : vector<8x32xf32>, vector<32x128xf32>, vector<8x128xf32> -> vector<8x128xf32>
      %c0_15 = arith.constant 0 : index
      %c0_16 = arith.constant 0 : index
      %16 = vector.load %arg4[%c0_15, %c0_16] : memref<1x128xf32, #tpu.memory_space<vmem>>, vector<1x128xf32>
      %17 = vector.broadcast %16 : vector<1x128xf32> to vector<8x128xf32>
      %18 = arith.addf %15, %17 : vector<8x128xf32>
      %c0_17 = arith.constant 0 : index
      %c0_18 = arith.constant 0 : index
      %19 = vector.load %arg7[%c0_17, %c0_18] : memref<8x128xf32, #tpu.memory_space<vmem>>, vector<8x128xf32>
      tpu.vector_store %arg7[%c0_17, %c0_18], %18 {strides = array<i32>} : memref<8x128xf32, #tpu.memory_space<vmem>>, vector<8x128xf32>,
    } else {
    }
    %c0 = arith.constant 0 : index
    %c0_1 = arith.constant 0 : index
    %c0_2 = arith.constant 0 : index
    %3 = vector.load %arg5[%c0, %c0_1, %c0_2] : memref<1x8x8xf32, #tpu.memory_space<vmem>>, vector<1x8x8xf32>
    %4 = vector.shape_cast %3 : vector<1x8x8xf32> to vector<8x8xf32>
    %c0_3 = arith.constant 0 : index
    %c0_4 = arith.constant 0 : index
    %5 = vector.load %arg7[%c0_3, %c0_4] : memref<8x128xf32, #tpu.memory_space<vmem>>, vector<8x128xf32>
    %cst = arith.constant dense<0.000000e+00> : vector<8x128xf32>
    %6 = tpu.matmul %4, %5, %cst {dimension_numbers = #tpu.dot_dimension_numbers<[1], [0], [0], [1], [0, 0, 1, 1], [], []>} : vector<8x8xf32>, vector<8x128xf32>, vector<8x128xf32> -> vector<8x128xf32>
    %cst_5 = arith.constant 0.000000e+00 : f32
    %7 = vector.broadcast %cst_5 : f32 to vector<8x128xf32>
    %8 = arith.maximumf %6, %7 : vector<8x128xf32>
    %c0_6 = arith.constant 0 : index
    %c0_7 = arith.constant 0 : index
    %c0_8 = arith.constant 0 : index
    %9 = vector.load %arg6[%c0_6, %c0_7, %c0_8] : memref<1x8x128xf32, #tpu.memory_space<vmem>>, vector<1x8x128xf32>
    %10 = vector.shape_cast %9 : vector<1x8x128xf32> to vector<8x128xf32>
    %11 = vector.shape_cast %8 : vector<8x128xf32> to vector<1x8x128xf32>
    tpu.vector_store %arg6[%c0_6, %c0_7, %c0_8], %11 {strides = array<i32>} : memref<1x8x128xf32, #tpu.memory_space<vmem>>, vector<1x8x128xf32>,
    return
  }
  func.func @transform_0(%arg0: i32, %arg1: i32) -> (i32, i32, i32) {
    %c0_i32 = arith.constant 0 : i32
    %c0_i32_0 = arith.constant 0 : i32
    %c0_i32_1 = arith.constant 0 : i32
    return %arg0, %c0_i32, %c0_i32_0 : i32, i32, i32
  }
  func.func @transform_1(%arg0: i32, %arg1: i32) -> (i32, i32) {
    %c0_i32 = arith.constant 0 : i32
    %c0_i32_0 = arith.constant 0 : i32
    %c0_i32_1 = arith.constant 0 : i32
    return %c0_i32, %c0_i32_0 : i32, i32
  }
  func.func @transform_2(%arg0: i32, %arg1: i32) -> (i32, i32) {
    %c0_i32 = arith.constant 0 : i32
    %c0_i32_0 = arith.constant 0 : i32
    %c0_i32_1 = arith.constant 0 : i32
    return %c0_i32, %c0_i32_0 : i32, i32
  }
  func.func @transform_3(%arg0: i32, %arg1: i32) -> (i32, i32, i32) {
    %c0_i32 = arith.constant 0 : i32
    %c0_i32_0 = arith.constant 0 : i32
    return %arg0, %arg1, %c0_i32 : i32, i32, i32
  }
  func.func @transform_4(%arg0: i32, %arg1: i32) -> (i32, i32, i32) {
    %c0_i32 = arith.constant 0 : i32
    %c0_i32_0 = arith.constant 0 : i32
    return %arg0, %arg1, %c0_i32 : i32, i32, i32
  }
}

</mosaic_0001>

<llo_original>
// kernel: tpu_custom_call.1
$region0: #{tpu_custom_call.1}
  #allocation0 [shape = 'u32[]', space=smem, size = 0x4, offset = 0x4, fixed_abs, tag = 'smem constant byte address 0x4 - core index']
  #allocation1 [shape = 'u32[72,128]{1,0:T(1,128)}', space=vmem, size = 0x9000, scoped, tag = 'internal scratch']
  #allocation2 [shape = 'f32[8,128]{1,0:T(8,128)}', space=vmem, size = 0x1000, scoped, tag = 'scratch operand']
  %s0 = inlined_call_operand.hbm [shape: f32[2,8,32], index: 0, kind: input, shape index: {}]
  %s1 = inlined_call_operand.hbm [shape: f32[32,128], index: 1, kind: input, shape index: {}]
  %s2 = inlined_call_operand.vmem [shape: f32[1,128], index: 2, kind: input, shape index: {}]
  %s3 = inlined_call_operand.hbm [shape: f32[2,8,8], index: 3, kind: input, shape index: {}]
  %s4 = inlined_call_operand.hbm [shape: f32[2,8,128], index: 4, kind: output, shape index: {}]
  %s5 = sld [smem:[#allocation0]]
  $region65: #{tpu_custom_call.1} parent=0
    _
  %s7 = ssub.s32 1, %s5
  %s8 = scalar_select 0, %s7, %s5
  $region1: #{tpu_custom_call.1} parent=0
    #allocation3 [shape = 'u8[8192]{0}', space=vmem, size = 0x2000, scoped, tag = 'input window, operand 0']
    #allocation4 [shape = 's32[2]{0}', space=sflag, size = 0x8, scoped, tag = 'scoped memory for tpu_custom_call.1']
    #allocation5 [shape = 's32[2]{0}', space=sflag, size = 0x8, scoped, tag = 'scoped memory for tpu_custom_call.1']
    #allocation6 [shape = 'u8[16384]{0}', space=vmem, size = 0x4000, scoped, tag = 'input window, operand 1, single buffered']
    #allocation7 [shape = 's32[1]{0}', space=sflag, size = 0x4, scoped, tag = 'scoped memory for tpu_custom_call.1']
    #allocation8 [shape = 'u8[8192]{0}', space=vmem, size = 0x2000, scoped, tag = 'input window, operand 3']
    #allocation9 [shape = 'u8[8192]{0}', space=vmem, size = 0x2000, scoped, tag = 'output window, operand 0']
    %9 = vsyncpa [#allocation4], 0
    %s10 = scalar_lea.sflag [#allocation4], 1
    %11 = vsyncpa %s10, 0
    %12 = vsyncpa [#allocation7], 0
    %13 = vsyncpa [#allocation5], 0
    %s14 = scalar_lea.sflag [#allocation5], 1
    %15 = vsyncpa %s14, 0
    loop: start=0, step=1, limit=4
    $region2: #{tpu_custom_call.1} parent=1 // loop_pre_header
      _
    $region3: #{tpu_custom_call.1} parent=1 // loop_header
      %s17 = sphi 0, %s21
      %p18 = scmp.ge.s32.totalorder %s17, 4
      %s24 = sphi 0, %s36
      %s25 = sphi 0, %s32
      %s26 = sphi 0, %s24
      %s27 = sphi 0, %s25
      %s28 = sphi 0, %s26
      %s29 = sphi 0, %s27
      %s39 = sphi 0, %s41
      %s42 = sphi 0, %s39
      %s43 = sphi 0, %s42
      %s59 = sphi 0, %s43
      %s63 = sphi 0, %s63
      %s65 = sphi 0, %s63
      %s66 = sphi 0, %s65
      %s80 = sphi 0, %s66
      %s84 = sphi 0, %s84
      %s86 = sphi 0, %s84
      %s87 = sphi 0, %s86
      %s101 = sphi 0, %s87
      %s109 = sphi 0, %s111
      %s112 = sphi 0, %s109
      %s113 = sphi 0, %s112
      %s129 = sphi 0, %s113
      %s137 = sphi 0, %s139
      %s140 = sphi 0, %s137
      %s141 = sphi 0, %s140
      %s157 = sphi 0, %s141
    $region4: #{tpu_custom_call.1} parent=1 // loop_header_branch
      %20 = sbr.rel (%p18) target = $region8
    $region5: #{tpu_custom_call.1} parent=1 // loop_body
      %s22 = ssub.s32 %s17, 1
      %s23 = ssub.s32 %s17, 2
      %s30 = sadd.s32 1, %s25
      %p31 = scmp.ge.s32.totalorder %s30, 1
      %s32 = scalar_select %p31, 0, %s30
      %s33 = sadd.s32 1, %s24
      %s34 = scalar_select %p31, %s33, %s24
      %p35 = scmp.ge.s32.totalorder %s34, 2
      %s36 = scalar_select %p35, 0, %s34
      %s37 = ssub.s32 %s24, %s36
      %p38 = scmp.eq.s32.totalorder %s37, 0
      %s40 = sadd.s32 %s39, 1
      %s41 = scalar_select %p38, %s39, %s40
      %p44 = pneg %p38
      %p45 = scmp.eq.s32.totalorder %s17, 1
      %p46 = por %p44, %p45
      %p47 = scmp.ne.s32.totalorder %s39, %s42
      %p48 = scmp.eq.s32.totalorder %s17, 0
      %p49 = por %p47, %p48
      %p50 = scmp.ne.s32.totalorder %s39, %s42
      %p51 = scmp.eq.s32.totalorder %s22, 1
      %p52 = por %p50, %p51
      %p53 = scmp.ne.s32.totalorder %s42, %s43
      %p54 = scmp.eq.s32.totalorder %s22, 0
      %p55 = por %p53, %p54
      %p56 = scmp.ne.s32.totalorder %s42, %s43
      %p57 = scmp.eq.s32.totalorder %s23, 1
      %p58 = por %p56, %p57
      %p60 = scmp.ne.s32.totalorder %s43, %s59
      %p61 = scmp.eq.s32.totalorder %s23, 0
      %p62 = por %p60, %p61
      %s64 = sadd.s32 %s63, 1
      %p67 = scmp.eq.s32.totalorder %s17, 1
      %p68 = scmp.ne.s32.totalorder %s63, %s65
      %p69 = scmp.eq.s32.totalorder %s17, 0
      %p70 = por %p68, %p69
      %p71 = scmp.ne.s32.totalorder %s63, %s65
      %p72 = scmp.eq.s32.totalorder %s22, 1
      %p73 = por %p71, %p72
      %p74 = scmp.ne.s32.totalorder %s65, %s66
      %p75 = scmp.eq.s32.totalorder %s22, 0
      %p76 = por %p74, %p75
      %p77 = scmp.ne.s32.totalorder %s65, %s66
      %p78 = scmp.eq.s32.totalorder %s23, 1
      %p79 = por %p77, %p78
      %p81 = scmp.ne.s32.totalorder %s66, %s80
      %p82 = scmp.eq.s32.totalorder %s23, 0
      %p83 = por %p81, %p82
      %s85 = sadd.s32 %s84, 1
      %p88 = scmp.eq.s32.totalorder %s17, 1
      %p89 = scmp.ne.s32.totalorder %s84, %s86
      %p90 = scmp.eq.s32.totalorder %s17, 0
      %p91 = por %p89, %p90
      %p92 = scmp.ne.s32.totalorder %s84, %s86
      %p93 = scmp.eq.s32.totalorder %s22, 1
      %p94 = por %p92, %p93
      %p95 = scmp.ne.s32.totalorder %s86, %s87
      %p96 = scmp.eq.s32.totalorder %s22, 0
      %p97 = por %p95, %p96
      %p98 = scmp.ne.s32.totalorder %s86, %s87
      %p99 = scmp.eq.s32.totalorder %s23, 1
      %p100 = por %p98, %p99
      %p102 = scmp.ne.s32.totalorder %s87, %s101
      %p103 = scmp.eq.s32.totalorder %s23, 0
      %p104 = por %p102, %p103
      %s105 = ssub.s32 %s24, %s36
      %s106 = ssub.s32 %s25, %s32
      %s107 = sor.u32 %s105, %s106
      %p108 = scmp.eq.s32.totalorder %s107, 0
      %s110 = sadd.s32 %s109, 1
      %s111 = scalar_select %p108, %s109, %s110
      %p114 = pneg %p108
      %p115 = scmp.eq.s32.totalorder %s17, 1
      %p116 = por %p114, %p115
      %p117 = scmp.ne.s32.totalorder %s109, %s112
      %p118 = scmp.eq.s32.totalorder %s17, 0
      %p119 = por %p117, %p118
      %p120 = scmp.ne.s32.totalorder %s109, %s112
      %p121 = scmp.eq.s32.totalorder %s22, 1
      %p122 = por %p120, %p121
      %p123 = scmp.ne.s32.totalorder %s112, %s113
      %p124 = scmp.eq.s32.totalorder %s22, 0
      %p125 = por %p123, %p124
      %p126 = scmp.ne.s32.totalorder %s112, %s113
      %p127 = scmp.eq.s32.totalorder %s23, 1
      %p128 = por %p126, %p127
      %p130 = scmp.ne.s32.totalorder %s113, %s129
      %p131 = scmp.eq.s32.totalorder %s23, 0
      %p132 = por %p130, %p131
      %s133 = ssub.s32 %s24, %s36
      %s134 = ssub.s32 %s25, %s32
      %s135 = sor.u32 %s133, %s134
      %p136 = scmp.eq.s32.totalorder %s135, 0
      %s138 = sadd.s32 %s137, 1
      %s139 = scalar_select %p136, %s137, %s138
      %p142 = pneg %p136
      %p143 = scmp.eq.s32.totalorder %s17, 1
      %p144 = por %p142, %p143
      %p145 = scmp.ne.s32.totalorder %s137, %s140
      %p146 = scmp.eq.s32.totalorder %s17, 0
      %p147 = por %p145, %p146
      %p148 = scmp.ne.s32.totalorder %s137, %s140
      %p149 = scmp.eq.s32.totalorder %s22, 1
      %p150 = por %p148, %p149
      %p151 = scmp.ne.s32.totalorder %s140, %s141
      %p152 = scmp.eq.s32.totalorder %s22, 0
      %p153 = por %p151, %p152
      %p154 = scmp.ne.s32.totalorder %s140, %s141
      %p155 = scmp.eq.s32.totalorder %s23, 1
      %p156 = por %p154, %p155
      %p158 = scmp.ne.s32.totalorder %s141, %s157
      %p159 = scmp.eq.s32.totalorder %s23, 0
      %p160 = por %p158, %p159
      %p161 = scmp.le.s32.totalorder 1, %s17
      %p162 = scmp.lt.s32.totalorder %s17, 3
      %p163 = pnand %p161, %p162
      %p164 = pneg %p163
      // Predicated region
      $region9: #{tpu_custom_call.1} parent=5 // pred_check
        _
      $region10: #{tpu_custom_call.1} parent=5 // pred_check_branch
        %166 = sbr.rel (%p163) target = $region12
      $region11: #{tpu_custom_call.1} parent=5 // pred_region
        %s167 = ssub.s32 %s17, 1
        // Predicated region
        $region13: #{tpu_custom_call.1} parent=11 // pred_check
          %p168 = pneg %p76
        $region14: #{tpu_custom_call.1} parent=11 // pred_check_branch
          %170 = sbr.rel (%p168) target = $region16
        $region15: #{tpu_custom_call.1} parent=11 // pred_region
          %172 = vsyncadd [#allocation7], 0
          %s173 = sshll.u32 %s1, 4
          %s174 = int_to_ptr.hbm [resolvable:$true] %s173
          %s175 = sshll.u32 [#allocation6], 4
          %s176 = int_to_ptr.vmem [resolvable:$true] %s175
          %181 = dma.hbm_to_vmem [thread:$0]  %s174, 512, %s176, [#allocation7], 128, 128, 8
        $region16: #{tpu_custom_call.1} parent=11 // pred_fallthru
          _
        // Predicated region
        $region17: #{tpu_custom_call.1} parent=11 // pred_check
          %p182 = pneg %p97
        $region18: #{tpu_custom_call.1} parent=11 // pred_check_branch
          %184 = sbr.rel (%p182) target = $region20
        $region19: #{tpu_custom_call.1} parent=11 // pred_region
          _
        $region20: #{tpu_custom_call.1} parent=11 // pred_fallthru
          _
      $region12: #{tpu_custom_call.1} parent=5 // pred_fallthru
        _
      %p185 = scmp.lt.s32.totalorder %s17, 2
      // Predicated region
      $region21: #{tpu_custom_call.1} parent=5 // pred_check
        %p186 = pneg %p185
      $region22: #{tpu_custom_call.1} parent=5 // pred_check_branch
        %188 = sbr.rel (%p186) target = $region24
      $region23: #{tpu_custom_call.1} parent=5 // pred_region
        // Predicated region
        $region25: #{tpu_custom_call.1} parent=23 // pred_check
          %p189 = pneg %p49
        $region26: #{tpu_custom_call.1} parent=23 // pred_check_branch
          %191 = sbr.rel (%p189) target = $region28
        $region27: #{tpu_custom_call.1} parent=23 // pred_region
          %s192 = sand.u32 %s17, 1
          %s193 = scalar_lea.sflag [#allocation4], %s192
          %s194 = sand.u32 %s39, 1
          %s195 = smul.addr %s194, 8
          %s196 = scalar_lea.vmem [#allocation3], %s195
          %198 = vsyncadd %s193, 0
          %s199 = smul.addr %s24, 8
          %s200 = scalar_lea.hbm %s0, %s199
          %s202 = sshll.u32 %s200, 4
          %s203 = int_to_ptr.hbm [resolvable:$true] %s202
          %s204 = sshll.u32 %s196, 4
          %s205 = int_to_ptr.vmem [resolvable:$true] %s204
          %207 = dma.hbm_to_vmem [thread:$0]  %s203, 128, %s205, %s193
        $region28: #{tpu_custom_call.1} parent=23 // pred_fallthru
          _
        // Predicated region
        $region29: #{tpu_custom_call.1} parent=23 // pred_check
          %p208 = pneg %p119
        $region30: #{tpu_custom_call.1} parent=23 // pred_check_branch
          %210 = sbr.rel (%p208) target = $region32
        $region31: #{tpu_custom_call.1} parent=23 // pred_region
          %s211 = sand.u32 %s17, 1
          %s212 = scalar_lea.sflag [#allocation4], %s211
          %s213 = sand.u32 %s109, 1
          %s214 = smul.addr %s213, 8
          %s215 = scalar_lea.vmem [#allocation8], %s214
          %217 = vsyncadd %s212, 0
          %s218 = sadd.s32 %s25, %s24
          %s219 = smul.addr %s218, 8
          %s220 = scalar_lea.hbm %s3, %s219
          %s222 = sshll.u32 %s220, 4
          %s223 = int_to_ptr.hbm [resolvable:$true] %s222
          %s224 = sshll.u32 %s215, 4
          %s225 = int_to_ptr.vmem [resolvable:$true] %s224
          %227 = dma.hbm_to_vmem [thread:$0]  %s223, 128, %s225, %s212
        $region32: #{tpu_custom_call.1} parent=23 // pred_fallthru
          _
      $region24: #{tpu_custom_call.1} parent=5 // pred_fallthru
        _
      %p228 = scmp.le.s32.totalorder 1, %s17
      %p229 = scmp.lt.s32.totalorder %s17, 3
      %p230 = pnand %p228, %p229
      %p231 = pneg %p230
      // Predicated region
      $region33: #{tpu_custom_call.1} parent=5 // pred_check
        _
      $region34: #{tpu_custom_call.1} parent=5 // pred_check_branch
        %233 = sbr.rel (%p230) target = $region36
      $region35: #{tpu_custom_call.1} parent=5 // pred_region
        %s234 = ssub.s32 %s17, 1
        %s235 = sand.u32 %s22, 1
        %s236 = scalar_lea.sflag [#allocation4], %s235
        %s237 = sand.u32 %s42, 1
        %s238 = smul.addr %s237, 8
        %s239 = scalar_lea.vmem [#allocation3], %s238
        // Predicated region
        $region37: #{tpu_custom_call.1} parent=35 // pred_check
          %p240 = pneg %p55
        $region38: #{tpu_custom_call.1} parent=35 // pred_check_branch
          %242 = sbr.rel (%p240) target = $region40
        $region39: #{tpu_custom_call.1} parent=35 // pred_region
          %244 = dma.done %s236, 128
        $region40: #{tpu_custom_call.1} parent=35 // pred_fallthru
          _
        // Predicated region
        $region41: #{tpu_custom_call.1} parent=35 // pred_check
          %p245 = pneg %p76
        $region42: #{tpu_custom_call.1} parent=35 // pred_check_branch
          %247 = sbr.rel (%p245) target = $region44
        $region43: #{tpu_custom_call.1} parent=35 // pred_region
          %249 = dma.done [#allocation7], 512
        $region44: #{tpu_custom_call.1} parent=35 // pred_fallthru
          _
        %s250 = sand.u32 %s22, 1
        %s251 = scalar_lea.sflag [#allocation4], %s250
        %s252 = sand.u32 %s112, 1
        %s253 = smul.addr %s252, 8
        %s254 = scalar_lea.vmem [#allocation8], %s253
        // Predicated region
        $region45: #{tpu_custom_call.1} parent=35 // pred_check
          %p255 = pneg %p125
        $region46: #{tpu_custom_call.1} parent=35 // pred_check_branch
          %257 = sbr.rel (%p255) target = $region48
        $region47: #{tpu_custom_call.1} parent=35 // pred_region
          %259 = dma.done %s251, 128
        $region48: #{tpu_custom_call.1} parent=35 // pred_fallthru
          _
        %s260 = sand.u32 %s22, 1
        %s261 = scalar_lea.sflag [#allocation4], %s260
        %s262 = sand.u32 %s42, 1
        %s263 = smul.addr %s262, 8
        %s264 = scalar_lea.vmem [#allocation3], %s263
        %p265 = pneg %p55
        %p266 = pneg %p52
        %p267 = pneg %p76
        %p268 = pneg %p73
        %p269 = pneg %p97
        %p270 = pneg %p94
        %s271 = sand.u32 %s22, 1
        %s272 = scalar_lea.sflag [#allocation4], %s271
        %s273 = sand.u32 %s112, 1
        %s274 = smul.addr %s273, 8
        %s275 = scalar_lea.vmem [#allocation8], %s274
        %p276 = pneg %p125
        %p277 = pneg %p122
        %p278 = pneg %p153
        %p279 = pneg %p150
        %s280 = sand.u32 %s140, 1
        %s281 = scalar_lea.sflag [#allocation5], %s280
        %s282 = sand.u32 %s140, 1
        %s283 = smul.addr %s282, 8
        %s284 = scalar_lea.vmem [#allocation9], %s283
        %p285 = scmp.eq.s32.totalorder %s27, 0
        // Predicated region
        $region49: #{tpu_custom_call.1} parent=35 // pred_check
          %p286 = pneg %p285
        $region50: #{tpu_custom_call.1} parent=35 // pred_check_branch
          %288 = sbr.rel (%p286) target = $region52
        $region51: #{tpu_custom_call.1} parent=35 // pred_region
          %v289 = vld [vmem:[%s239] sm:$0xff]
          %v290 = vld [vmem:[#allocation6] sm:$0xff]
          %v291 = vld [vmem:[#allocation6 + $0x8] sm:$0xff]
          %v292 = vld [vmem:[#allocation6 + $0x10] sm:$0xff]
          %v293 = vld [vmem:[#allocation6 + $0x18] sm:$0xff]
          %v294 = vld [vmem:[%s2] sm:$0x1]
          %v296 = vperm.slane %v294, 0
          %vm298 = vcmask 261120
          %v300 = vsel %vm298, %v289, 0
          %302 = vmatpush.msra.mxu0 0.0
          %303 = vmatpush.msra.mxu0 0.0
          %304 = vmatpush.msra.mxu0 0.0
          %305 = vmatpush.msra.mxu0 0.0
          %306 = vmatpush.msra.mxu0 0.0
          %307 = vmatpush.msra.mxu0 0.0
          %308 = vmatpush.msra.mxu0 0.0
          %309 = vmatpush.msra.mxu0 0.0
          %310 = vmatpush.msra.mxu0 0.0
          %311 = vmatpush.msra.mxu0 0.0
          %312 = vmatpush.msra.mxu0 0.0
          %313 = vmatpush.msra.mxu0 0.0
          %314 = vmatpush.msra.mxu0 %v293
          %315 = vmatpush.msra.mxu0 %v292
          %316 = vmatpush.msra.mxu0 %v291
          %317 = vmatpush.msra.mxu0 %v290
          %318 = vmatmul.f32.gmra.mxu0 %v300
          %v319 = vpop.f32.mrf.mxu0
          %v320 = vadd.f32 %v296, %v319
          %321 = vdwg.mxu0
          %322 = vst [vmem:[#allocation2] sm:$0xff] %v320
        $region52: #{tpu_custom_call.1} parent=35 // pred_fallthru
          _
        %v323 = vld [vmem:[%s254] sm:$0xff]
        %v324 = vld [vmem:[#allocation2] sm:$0xff]
        %vm325 = vcmask 64512
        %v327 = vsel %vm325, %v323, 0
        %329 = vmatpush.msra.mxu0 0.0
        %330 = vmatpush.msra.mxu0 0.0
        %331 = vmatpush.msra.mxu0 0.0
        %332 = vmatpush.msra.mxu0 0.0
        %333 = vmatpush.msra.mxu0 0.0
        %334 = vmatpush.msra.mxu0 0.0
        %335 = vmatpush.msra.mxu0 0.0
        %336 = vmatpush.msra.mxu0 0.0
        %337 = vmatpush.msra.mxu0 0.0
        %338 = vmatpush.msra.mxu0 0.0
        %339 = vmatpush.msra.mxu0 0.0
        %340 = vmatpush.msra.mxu0 0.0
        %341 = vmatpush.msra.mxu0 0.0
        %342 = vmatpush.msra.mxu0 0.0
        %343 = vmatpush.msra.mxu0 0.0
        %344 = vmatpush.msra.mxu0 %v324
        %345 = vmatmul.f32.gmra.mxu0 %v327
        %v346 = vpop.f32.mrf.mxu0
        %v347 = vadd.f32 0.0, %v346
        %348 = vdwg.mxu0
        %v349 = vmax.f32 %v347, 0.0
        %350 = vst [vmem:[%s284] sm:$0xff] %v349
        %s351 = sand.u32 %s140, 1
        %s352 = scalar_lea.sflag [#allocation5], %s351
        %s353 = sand.u32 %s140, 1
        %s354 = smul.addr %s353, 8
        %s355 = scalar_lea.vmem [#allocation9], %s354
        // Predicated region
        $region53: #{tpu_custom_call.1} parent=35 // pred_check
          %p356 = pneg %p150
        $region54: #{tpu_custom_call.1} parent=35 // pred_check_branch
          %358 = sbr.rel (%p356) target = $region56
        $region55: #{tpu_custom_call.1} parent=35 // pred_region
          %360 = vsyncadd %s352, 0
          %s361 = sadd.s32 %s27, %s26
          %s362 = smul.addr %s361, 8
          %s363 = scalar_lea.hbm %s4, %s362
          %s365 = sshll.u32 %s355, 4
          %s366 = int_to_ptr.vmem [resolvable:$true] %s365
          %s367 = sshll.u32 %s363, 4
          %s368 = int_to_ptr.hbm [resolvable:$true] %s367
          %370 = dma.vmem_to_hbm [thread:$0]  %s366, 128, %s368, %s352
        $region56: #{tpu_custom_call.1} parent=35 // pred_fallthru
          _
      $region36: #{tpu_custom_call.1} parent=5 // pred_fallthru
        _
      %p371 = scmp.le.s32.totalorder 2, %s17
      // Predicated region
      $region57: #{tpu_custom_call.1} parent=5 // pred_check
        %p372 = pneg %p371
      $region58: #{tpu_custom_call.1} parent=5 // pred_check_branch
        %374 = sbr.rel (%p372) target = $region60
      $region59: #{tpu_custom_call.1} parent=5 // pred_region
        %s375 = ssub.s32 %s17, 2
        // Predicated region
        $region61: #{tpu_custom_call.1} parent=59 // pred_check
          %p376 = pneg %p156
        $region62: #{tpu_custom_call.1} parent=59 // pred_check_branch
          %378 = sbr.rel (%p376) target = $region64
        $region63: #{tpu_custom_call.1} parent=59 // pred_region
          %s379 = sand.u32 %s141, 1
          %s380 = scalar_lea.sflag [#allocation5], %s379
          %s381 = sand.u32 %s141, 1
          %s382 = smul.addr %s381, 8
          %s383 = scalar_lea.vmem [#allocation9], %s382
          %385 = dma.done %s380, 128
        $region64: #{tpu_custom_call.1} parent=59 // pred_fallthru
          _
      $region60: #{tpu_custom_call.1} parent=5 // pred_fallthru
        _
    $region6: #{tpu_custom_call.1} parent=1 // loop_footer
      %s21 = sadd.s32 1, %s17
    $region7: #{tpu_custom_call.1} parent=1 // loop_footer_branch
      %16 = sbr.rel target = $region3
    $region8: #{tpu_custom_call.1} parent=1 // loop_exit
      _
    %386 = vsyncpa [#allocation4], 1
    %s387 = scalar_lea.sflag [#allocation4], 1
    %388 = vsyncpa %s387, 1
    %389 = vsyncpa [#allocation7], 1
    %390 = vsyncpa [#allocation5], 1
    %s391 = scalar_lea.sflag [#allocation5], 1
    %392 = vsyncpa %s391, 1

</llo_original>
